<compile_context>
chip_gen: v7x
topology: tpu7x:2x2x1
jax: 0.10.0
libtpu: 0.0.40
codegen_flags: <defaults>
</compile_context>

<pallas_src>
import math

import jax
import jax.numpy as jnp
from jax.experimental import pallas as pl
from jax.experimental.pallas import tpu as pltpu

EPS = 1e-5  # nn.LayerNorm default

_WEIGHT_ORDER = ("avg", "ln1w", "ln1b", "wqkv", "bqkv", "wo", "bo",
                 "ln2w", "ln2b", "wfc", "bfc", "wpr", "bpr")


# --------------------------------------------------------------------------------------
# kernel
# --------------------------------------------------------------------------------------
def _make_kernel(tb, e):
    """Build the kernel for a fixed batch-tile width tb and feature width e (static)."""

    def kernel(x_ref,                                # (L, P)  P = tb*e, packed lanes (batch, feat)
               avg_ref,                              # (P, P)  block-diag ones(e,e)/e, f32
               ln1w_ref, ln1b_ref,                   # (1, P)
               wqkv_ref, bqkv_ref,                   # (P, 3P) bf16 (scale folded into Q), (1, 3P) f32
               wo_ref, bo_ref,                       # (P, P) bf16, (1, P)
               ln2w_ref, ln2b_ref,                   # (1, P)
               wfc_ref, bfc_ref,                     # (P, P) bf16, (1, P)
               wpr_ref, bpr_ref,                     # (P, P) bf16, (1, P)
               o_ref):                               # (L, P)
        L, P = x_ref.shape
        x = x_ref[...]                               # f32
        avg = avg_ref[...]                           # f32

        def seg_ln(z, w, b):
            # Per-32-lane-segment LayerNorm via block-diagonal averaging matmuls (exact, f32).
            mu = jnp.dot(z, avg, preferred_element_type=jnp.float32)
            d = z - mu
            var = jnp.dot(d * d, avg, preferred_element_type=jnp.float32)
            return d * jax.lax.rsqrt(var + EPS) * w + b

        # ---- ln_1 ----
        h = seg_ln(x, ln1w_ref[...], ln1b_ref[...])

        # ---- fused QKV projection on the packed slab (one matmul, 3P output lanes) ----
        qkv = jnp.dot(h.astype(jnp.bfloat16), wqkv_ref[...],
                      preferred_element_type=jnp.float32) + bqkv_ref[...]   # (L, 3P) f32

        # ---- single-head attention, per 32-lane batch segment (segments are independent) ----
        # TODO(synk): if TB*L grows large, evaluate one full-density score matmul with a
        # block-diagonal -inf mask (review item 9b) instead of TB small matmuls.
        parts = []
        for bidx in range(tb):
            lo = bidx * e
            qb = qkv[:, lo:lo + e].astype(jnp.bfloat16)              # (L, E) (already 1/sqrt(E)-scaled)
            kb = qkv[:, P + lo:P + lo + e].astype(jnp.bfloat16)      # (L, E)
            vb = qkv[:, 2 * P + lo:2 * P + lo + e].astype(jnp.bfloat16)
            s = jnp.einsum("ld,md->lm", qb, kb,
                           preferred_element_type=jnp.float32)       # (L, L)
            s = s - jnp.max(s, axis=-1, keepdims=True)
            p = jnp.exp(s)
            p = p * pl.reciprocal(jnp.sum(p, axis=-1, keepdims=True), approx=True)   # EUP, not VPU div
            parts.append(jnp.dot(p.astype(jnp.bfloat16), vb,
                                 preferred_element_type=jnp.float32))                # (L, E)
        attn = parts[0] if tb == 1 else jnp.concatenate(parts, axis=-1)              # (L, P)

        a = jnp.dot(attn.astype(jnp.bfloat16), wo_ref[...],
                    preferred_element_type=jnp.float32) + bo_ref[...]

        # ---- residual 1 ----
        x1 = x + a

        # ---- ln_2 + MLP (c_fc -> QuickGELU -> c_proj) ----
        h2 = seg_ln(x1, ln2w_ref[...], ln2b_ref[...])
        f = jnp.dot(h2.astype(jnp.bfloat16), wfc_ref[...],
                    preferred_element_type=jnp.float32) + bfc_ref[...]
        g = f * jax.nn.sigmoid(1.702 * f)            # QuickGELU (f32)
        m = jnp.dot(g.astype(jnp.bfloat16), wpr_ref[...],
                    preferred_element_type=jnp.float32) + bpr_ref[...]

        # ---- residual 2 ----
        o_ref[...] = x1 + m

    return kernel


# --------------------------------------------------------------------------------------
# one-time weight packing (call OUTSIDE the per-step / per-call path)
# --------------------------------------------------------------------------------------
def prepare_packed_params(params, tb):
    """Build packed, block-diagonal (tb copies) weights for the lane-packed kernel.
    Linear weights are transposed to (in, out), the 1/sqrt(E) attention scale is folded into
    Wq / bq (n_head == 1 so head_dim == E), matmul weights are stored in bf16."""
    E = params["ln1_w"].shape[0]
    scale = 1.0 / math.sqrt(E)
    eye_tb = jnp.eye(tb, dtype=jnp.float32)

    def blockdiag(w):                                 # (E, E) (in,out) -> (P, P)
        return jnp.kron(eye_tb, w.astype(jnp.float32))

    def tile_vec(v):                                  # (E,) -> (1, P)
        return jnp.tile(v.reshape(1, E).astype(jnp.float32), (1, tb))

    wq = params["in_proj_w"][:E].T * scale
    wk = params["in_proj_w"][E:2 * E].T
    wv = params["in_proj_w"][2 * E:].T
    wqkv = jnp.concatenate([blockdiag(wq), blockdiag(wk), blockdiag(wv)], axis=1)   # (P, 3P)
    bqkv = jnp.concatenate([tile_vec(params["in_proj_b"][:E] * scale),
                            tile_vec(params["in_proj_b"][E:2 * E]),
                            tile_vec(params["in_proj_b"][2 * E:])], axis=1)         # (1, 3P)

    avg = jnp.kron(eye_tb, jnp.full((E, E), 1.0 / E, dtype=jnp.float32))            # (P, P)

    return {
        "avg": avg,
        "ln1w": tile_vec(params["ln1_w"]), "ln1b": tile_vec(params["ln1_b"]),
        "wqkv": wqkv.astype(jnp.bfloat16), "bqkv": bqkv,
        "wo": blockdiag(params["out_proj_w"].T).astype(jnp.bfloat16),
        "bo": tile_vec(params["out_proj_b"]),
        "ln2w": tile_vec(params["ln2_w"]), "ln2b": tile_vec(params["ln2_b"]),
        "wfc": blockdiag(params["fc_w"].T).astype(jnp.bfloat16),
        "bfc": tile_vec(params["fc_b"]),
        "wpr": blockdiag(params["proj_w"].T).astype(jnp.bfloat16),
        "bpr": tile_vec(params["proj_b"]),
    }


# --------------------------------------------------------------------------------------
# generation-aware heuristics
# --------------------------------------------------------------------------------------
def _physical_vmem_bytes():
    try:
        info = pltpu.get_tpu_info()
        v = getattr(info, "vmem_capacity_bytes", None)
        if v:
            return int(v)
    except Exception:
        pass
    return 64 << 20       # conservative (v7x-sized) default if the query is unavailable


def _pick_block_batch(N, L, E):
    """Largest divisor of N giving a lane-dense, VMEM-fitting tile; prefer >=2 grid steps
    (keeps both v7x TensorCores busy; costs ~nothing on single-TC v5e/v6e)."""
    vmem = _physical_vmem_bytes()
    max_tile_bytes = (16 << 20) if vmem >= (100 << 20) else (6 << 20)
    f32 = 4

    def tile_bytes(d):                                 # activations + per-batch score/prob scratch
        return 12 * L * d * E * f32 + 3 * d * L * L * f32

    divs = [d for d in range(1, N + 1) if N % d == 0]
    lane_ok = [d for d in divs if (d * E) % 128 == 0 or d == N]
    fitting = [d for d in lane_ok if tile_bytes(d) <= max_tile_bytes]
    if not fitting:
        return lane_ok[0]
    multi = [d for d in fitting if N // d >= 2 and d * E >= 128]
    return multi[-1] if multi else fitting[-1]


def _vmem_limit_bytes(TB, L, E):
    vmem = _physical_vmem_bytes()
    f32 = 4
    P = TB * E
    weights = P * P * f32 + P * 3 * P * 2 + 3 * P * P * 2 + 16 * P * f32
    io_tiles = 2 * 2 * L * P * f32                     # double-buffered input + output blocks
    work = 24 * L * P * f32 + 4 * TB * L * L * f32
    est = weights + io_tiles + work
    ceiling = min(int(vmem * 0.72), 96 << 20)          # <=~46 MiB on v7x's 64 MiB VMEM
    return int(min(max(2 * est, 32 << 20), ceiling))


# --------------------------------------------------------------------------------------
# wrapper
# --------------------------------------------------------------------------------------
def residual_self_attention_pallas(x_lne, packed):
    """x_lne: (L, N, E) float32 (PyTorch seq-first layout). packed: prepare_packed_params output.
    Returns (L, N, E). No transposes: only free contiguous reshapes around the pallas_call."""
    L, N, E = x_lne.shape
    P = packed["avg"].shape[0]
    TB = P // E
    assert TB * E == P, (P, E)
    assert N % TB == 0, (N, TB)

    x2 = x_lne.reshape(L, N * E)                       # free (contiguous) reshape, no HBM pass

    x_spec = pl.BlockSpec((L, P), lambda b: (0, b))    # lane-dense packed block
    w_spec = pl.BlockSpec(memory_space=pltpu.MemorySpace.VMEM)   # whole-array, VMEM-resident
    weight_args = tuple(packed[k] for k in _WEIGHT_ORDER)

    out = pl.pallas_call(
        _make_kernel(TB, E),
        out_shape=jax.ShapeDtypeStruct((L, N * E), jnp.float32),
        grid=(N // TB,),
        in_specs=[x_spec] + [w_spec] * len(weight_args),
        out_specs=x_spec,
        compiler_params=pltpu.CompilerParams(
            dimension_semantics=("parallel",),
            vmem_limit_bytes=_vmem_limit_bytes(TB, L, E)),
    )(x2, *weight_args)

    return out.reshape(L, N, E)


# --------------------------------------------------------------------------------------
# pure-JAX reference (mirrors the PyTorch forward) and param init
# --------------------------------------------------------------------------------------
def residual_self_attention_ref(x_lne, params):
    L, N, E = x_lne.shape

    def ln(z, w, b):
        mu = jnp.mean(z, -1, keepdims=True)
        var = jnp.mean((z - mu) ** 2, -1, keepdims=True)
        return (z - mu) / jnp.sqrt(var + EPS) * w + b

    x = x_lne
    h = ln(x, params["ln1_w"], params["ln1_b"])
    q = h @ params["in_proj_w"][:E].T + params["in_proj_b"][:E]
    k = h @ params["in_proj_w"][E:2 * E].T + params["in_proj_b"][E:2 * E]
    v = h @ params["in_proj_w"][2 * E:].T + params["in_proj_b"][2 * E:]
    scale = 1.0 / math.sqrt(E)
    s = jnp.einsum("lne,mne->nlm", q * scale, k)
    p = jax.nn.softmax(s, axis=-1)
    a = jnp.einsum("nlm,mne->lne", p, v)
    a = a @ params["out_proj_w"].T + params["out_proj_b"]
    x1 = x + a
    h2 = ln(x1, params["ln2_w"], params["ln2_b"])
    f = h2 @ params["fc_w"].T + params["fc_b"]
    g = f * jax.nn.sigmoid(1.702 * f)
    m = g @ params["proj_w"].T + params["proj_b"]
    return x1 + m


def init_params(key, E):
    keys = jax.random.split(key, 8)
    scale = 0.1
    return {
        "in_proj_w": scale * jax.random.normal(keys[0], (3 * E, E), jnp.float32),
        "in_proj_b": scale * jax.random.normal(keys[1], (3 * E,), jnp.float32),
        "out_proj_w": scale * jax.random.normal(keys[2], (E, E), jnp.float32),
        "out_proj_b": scale * jax.random.normal(keys[3], (E,), jnp.float32),
        "ln1_w": jnp.ones((E,), jnp.float32),
        "ln1_b": jnp.zeros((E,), jnp.float32),
        "fc_w": scale * jax.random.normal(keys[4], (E, E), jnp.float32),
        "fc_b": scale * jax.random.normal(keys[5], (E,), jnp.float32),
        "proj_w": scale * jax.random.normal(keys[6], (E, E), jnp.float32),
        "proj_b": scale * jax.random.normal(keys[7], (E,), jnp.float32),
        "ln2_w": jnp.ones((E,), jnp.float32),
        "ln2_b": jnp.zeros((E,), jnp.float32),
    }


if __name__ == "__main__":
    L, N, E = 8, 2, 32                                 # seq=8, batch=2, output_dim=32
    key = jax.random.PRNGKey(0)
    kx, kp = jax.random.split(key)
    x = jax.random.normal(kx, (L, N, E), jnp.float32)
    params = init_params(kp, E)

    TB = _pick_block_batch(N, L, E)                    # tiling choice (generation-aware)
    prep = prepare_packed_params(params, TB)           # one-time weight packing (outside per-call path)

    fn = jax.jit(residual_self_attention_pallas)
    out = jax.block_until_ready(fn(x, prep))

    ref = residual_self_attention_ref(x, params)
    assert out.shape == (L, N, E)
    max_err = float(jnp.max(jnp.abs(out - ref)))
    # tolerance reflects bf16 matmul operands (f32 accumulation) + approx softmax reciprocal
    assert jnp.allclose(out, ref, rtol=3e-2, atol=3e-2), max_err

    print("KERNEL_OK")
</pallas_src>

<mosaic_0001>
module attributes {stable_mosaic.version = 11 : i64} {
  func.func @kernel(%arg0: i32, %arg1: memref<8x64xf32, #tpu.memory_space<vmem>>, %arg2: memref<64x64xf32, #tpu.memory_space<vmem>>, %arg3: memref<1x64xf32, #tpu.memory_space<vmem>>, %arg4: memref<1x64xf32, #tpu.memory_space<vmem>>, %arg5: memref<64x192xbf16, #tpu.memory_space<vmem>>, %arg6: memref<1x192xf32, #tpu.memory_space<vmem>>, %arg7: memref<64x64xbf16, #tpu.memory_space<vmem>>, %arg8: memref<1x64xf32, #tpu.memory_space<vmem>>, %arg9: memref<1x64xf32, #tpu.memory_space<vmem>>, %arg10: memref<1x64xf32, #tpu.memory_space<vmem>>, %arg11: memref<64x64xbf16, #tpu.memory_space<vmem>>, %arg12: memref<1x64xf32, #tpu.memory_space<vmem>>, %arg13: memref<64x64xbf16, #tpu.memory_space<vmem>>, %arg14: memref<1x64xf32, #tpu.memory_space<vmem>>, %arg15: memref<8x64xf32, #tpu.memory_space<vmem>>) attributes {dimension_semantics = [#tpu.dimension_semantics<parallel>], iteration_bounds = array<i64: 1>, scalar_prefetch = 0 : i64, scratch_operands = 0 : i64, tpu.core_type = #tpu.core_type<tc>, window_params = [{transform_indices = @transform_0, window_bounds = array<i64: 8, 64>}, {pipeline_mode = #tpu.pipeline_mode<synchronous>, transform_indices = @transform_1, window_bounds = array<i64: 64, 64>}, {pipeline_mode = #tpu.pipeline_mode<synchronous>, transform_indices = @transform_2, window_bounds = array<i64: 1, 64>}, {pipeline_mode = #tpu.pipeline_mode<synchronous>, transform_indices = @transform_3, window_bounds = array<i64: 1, 64>}, {pipeline_mode = #tpu.pipeline_mode<synchronous>, transform_indices = @transform_4, window_bounds = array<i64: 64, 192>}, {pipeline_mode = #tpu.pipeline_mode<synchronous>, transform_indices = @transform_5, window_bounds = array<i64: 1, 192>}, {pipeline_mode = #tpu.pipeline_mode<synchronous>, transform_indices = @transform_6, window_bounds = array<i64: 64, 64>}, {pipeline_mode = #tpu.pipeline_mode<synchronous>, transform_indices = @transform_7, window_bounds = array<i64: 1, 64>}, {pipeline_mode = #tpu.pipeline_mode<synchronous>, transform_indices = @transform_8, window_bounds = array<i64: 1, 64>}, {pipeline_mode = #tpu.pipeline_mode<synchronous>, transform_indices = @transform_9, window_bounds = array<i64: 1, 64>}, {pipeline_mode = #tpu.pipeline_mode<synchronous>, transform_indices = @transform_10, window_bounds = array<i64: 64, 64>}, {pipeline_mode = #tpu.pipeline_mode<synchronous>, transform_indices = @transform_11, window_bounds = array<i64: 1, 64>}, {pipeline_mode = #tpu.pipeline_mode<synchronous>, transform_indices = @transform_12, window_bounds = array<i64: 64, 64>}, {pipeline_mode = #tpu.pipeline_mode<synchronous>, transform_indices = @transform_13, window_bounds = array<i64: 1, 64>}, {transform_indices = @transform_14, window_bounds = array<i64: 8, 64>}]} {
    %c0 = arith.constant 0 : index
    %c0_0 = arith.constant 0 : index
    %0 = vector.load %arg1[%c0, %c0_0] : memref<8x64xf32, #tpu.memory_space<vmem>>, vector<8x64xf32>
    %c0_1 = arith.constant 0 : index
    %c0_2 = arith.constant 0 : index
    %1 = vector.load %arg2[%c0_1, %c0_2] : memref<64x64xf32, #tpu.memory_space<vmem>>, vector<64x64xf32>
    %c0_3 = arith.constant 0 : index
    %c0_4 = arith.constant 0 : index
    %2 = vector.load %arg3[%c0_3, %c0_4] : memref<1x64xf32, #tpu.memory_space<vmem>>, vector<1x64xf32>
    %c0_5 = arith.constant 0 : index
    %c0_6 = arith.constant 0 : index
    %3 = vector.load %arg4[%c0_5, %c0_6] : memref<1x64xf32, #tpu.memory_space<vmem>>, vector<1x64xf32>
    %cst = arith.constant dense<0.000000e+00> : vector<8x64xf32>
    %4 = tpu.matmul %0, %1, %cst {dimension_numbers = #tpu.dot_dimension_numbers<[1], [0], [0], [1], [0, 0, 1, 1], [], []>} : vector<8x64xf32>, vector<64x64xf32>, vector<8x64xf32> -> vector<8x64xf32>
    %5 = arith.subf %0, %4 : vector<8x64xf32>
    %6 = arith.mulf %5, %5 : vector<8x64xf32>
    %cst_7 = arith.constant dense<0.000000e+00> : vector<8x64xf32>
    %7 = tpu.matmul %6, %1, %cst_7 {dimension_numbers = #tpu.dot_dimension_numbers<[1], [0], [0], [1], [0, 0, 1, 1], [], []>} : vector<8x64xf32>, vector<64x64xf32>, vector<8x64xf32> -> vector<8x64xf32>
    %cst_8 = arith.constant 9.99999974E-6 : f32
    %8 = vector.broadcast %cst_8 : f32 to vector<8x64xf32>
    %9 = arith.addf %7, %8 : vector<8x64xf32>
    %10 = math.rsqrt %9 : vector<8x64xf32>
    %11 = arith.mulf %5, %10 : vector<8x64xf32>
    %12 = vector.broadcast %2 : vector<1x64xf32> to vector<8x64xf32>
    %13 = arith.mulf %11, %12 : vector<8x64xf32>
    %14 = vector.broadcast %3 : vector<1x64xf32> to vector<8x64xf32>
    %15 = arith.addf %13, %14 : vector<8x64xf32>
    %16 = arith.truncf %15 : vector<8x64xf32> to vector<8x64xbf16>
    %c0_9 = arith.constant 0 : index
    %c0_10 = arith.constant 0 : index
    %17 = vector.load %arg5[%c0_9, %c0_10] : memref<64x192xbf16, #tpu.memory_space<vmem>>, vector<64x192xbf16>
    %cst_11 = arith.constant dense<0.000000e+00> : vector<8x192xf32>
    %18 = tpu.matmul %16, %17, %cst_11 {dimension_numbers = #tpu.dot_dimension_numbers<[1], [0], [0], [1], [0, 0, 1, 1], [], []>} : vector<8x64xbf16>, vector<64x192xbf16>, vector<8x192xf32> -> vector<8x192xf32>
    %c0_12 = arith.constant 0 : index
    %c0_13 = arith.constant 0 : index
    %19 = vector.load %arg6[%c0_12, %c0_13] : memref<1x192xf32, #tpu.memory_space<vmem>>, vector<1x192xf32>
    %20 = vector.broadcast %19 : vector<1x192xf32> to vector<8x192xf32>
    %21 = arith.addf %18, %20 : vector<8x192xf32>
    %22 = vector.extract_strided_slice %21 {offsets = [0, 0], sizes = [8, 32], strides = [1, 1]} : vector<8x192xf32> to vector<8x32xf32>
    %23 = arith.truncf %22 : vector<8x32xf32> to vector<8x32xbf16>
    %24 = vector.extract_strided_slice %21 {offsets = [0, 64], sizes = [8, 32], strides = [1, 1]} : vector<8x192xf32> to vector<8x32xf32>
    %25 = arith.truncf %24 : vector<8x32xf32> to vector<8x32xbf16>
    %26 = vector.extract_strided_slice %21 {offsets = [0, 128], sizes = [8, 32], strides = [1, 1]} : vector<8x192xf32> to vector<8x32xf32>
    %27 = arith.truncf %26 : vector<8x32xf32> to vector<8x32xbf16>
    "tpu.trace_start"() <{level = 10 : i32, message = "ld,md->lm"}> : () -> ()
    %cst_14 = arith.constant dense<0.000000e+00> : vector<8x8xf32>
    %28 = tpu.matmul %23, %25, %cst_14 {dimension_numbers = #tpu.dot_dimension_numbers<[1], [1], [0], [0], [0, 0, 1, 0], [], []>} : vector<8x32xbf16>, vector<8x32xbf16>, vector<8x8xf32> -> vector<8x8xf32>
    "tpu.trace_stop"() : () -> ()
    %cst_15 = arith.constant dense<0xFF800000> : vector<8xf32>
    %29 = vector.multi_reduction <maximumf>, %28, %cst_15 [1] : vector<8x8xf32> to vector<8xf32>
    %30 = vector.shape_cast %29 : vector<8xf32> to vector<8x1xf32>
    %31 = vector.broadcast %30 : vector<8x1xf32> to vector<8x8xf32>
    %32 = arith.subf %28, %31 : vector<8x8xf32>
    %33 = math.exp %32 : vector<8x8xf32>
    %cst_16 = arith.constant dense<0.000000e+00> : vector<8xf32>
    %34 = vector.multi_reduction <add>, %33, %cst_16 [1] : vector<8x8xf32> to vector<8xf32>
    %35 = vector.shape_cast %34 : vector<8xf32> to vector<8x1xf32>
    %36 = tpu.reciprocal %35 {approx = true} : vector<8x1xf32> -> vector<8x1xf32>
    %37 = vector.broadcast %36 : vector<8x1xf32> to vector<8x8xf32>
    %38 = arith.mulf %33, %37 : vector<8x8xf32>
    %39 = arith.truncf %38 : vector<8x8xf32> to vector<8x8xbf16>
    %cst_17 = arith.constant dense<0.000000e+00> : vector<8x32xf32>
    %40 = tpu.matmul %39, %27, %cst_17 {dimension_numbers = #tpu.dot_dimension_numbers<[1], [0], [0], [1], [0, 0, 1, 1], [], []>} : vector<8x8xbf16>, vector<8x32xbf16>, vector<8x32xf32> -> vector<8x32xf32>
    %41 = vector.extract_strided_slice %21 {offsets = [0, 32], sizes = [8, 32], strides = [1, 1]} : vector<8x192xf32> to vector<8x32xf32>
    %42 = arith.truncf %41 : vector<8x32xf32> to vector<8x32xbf16>
    %43 = vector.extract_strided_slice %21 {offsets = [0, 96], sizes = [8, 32], strides = [1, 1]} : vector<8x192xf32> to vector<8x32xf32>
    %44 = arith.truncf %43 : vector<8x32xf32> to vector<8x32xbf16>
    %45 = vector.extract_strided_slice %21 {offsets = [0, 160], sizes = [8, 32], strides = [1, 1]} : vector<8x192xf32> to vector<8x32xf32>
    %46 = arith.truncf %45 : vector<8x32xf32> to vector<8x32xbf16>
    "tpu.trace_start"() <{level = 10 : i32, message = "ld,md->lm"}> : () -> ()
    %cst_18 = arith.constant dense<0.000000e+00> : vector<8x8xf32>
    %47 = tpu.matmul %42, %44, %cst_18 {dimension_numbers = #tpu.dot_dimension_numbers<[1], [1], [0], [0], [0, 0, 1, 0], [], []>} : vector<8x32xbf16>, vector<8x32xbf16>, vector<8x8xf32> -> vector<8x8xf32>
    "tpu.trace_stop"() : () -> ()
    %cst_19 = arith.constant dense<0xFF800000> : vector<8xf32>
    %48 = vector.multi_reduction <maximumf>, %47, %cst_19 [1] : vector<8x8xf32> to vector<8xf32>
    %49 = vector.shape_cast %48 : vector<8xf32> to vector<8x1xf32>
    %50 = vector.broadcast %49 : vector<8x1xf32> to vector<8x8xf32>
    %51 = arith.subf %47, %50 : vector<8x8xf32>
    %52 = math.exp %51 : vector<8x8xf32>
    %cst_20 = arith.constant dense<0.000000e+00> : vector<8xf32>
    %53 = vector.multi_reduction <add>, %52, %cst_20 [1] : vector<8x8xf32> to vector<8xf32>
    %54 = vector.shape_cast %53 : vector<8xf32> to vector<8x1xf32>
    %55 = tpu.reciprocal %54 {approx = true} : vector<8x1xf32> -> vector<8x1xf32>
    %56 = vector.broadcast %55 : vector<8x1xf32> to vector<8x8xf32>
    %57 = arith.mulf %52, %56 : vector<8x8xf32>
    %58 = arith.truncf %57 : vector<8x8xf32> to vector<8x8xbf16>
    %cst_21 = arith.constant dense<0.000000e+00> : vector<8x32xf32>
    %59 = tpu.matmul %58, %46, %cst_21 {dimension_numbers = #tpu.dot_dimension_numbers<[1], [0], [0], [1], [0, 0, 1, 1], [], []>} : vector<8x8xbf16>, vector<8x32xbf16>, vector<8x32xf32> -> vector<8x32xf32>
    %60 = tpu.concatenate %40, %59 in 1 : vector<8x32xf32>, vector<8x32xf32> -> vector<8x64xf32>
    %61 = arith.truncf %60 : vector<8x64xf32> to vector<8x64xbf16>
    %c0_22 = arith.constant 0 : index
    %c0_23 = arith.constant 0 : index
    %62 = vector.load %arg7[%c0_22, %c0_23] : memref<64x64xbf16, #tpu.memory_space<vmem>>, vector<64x64xbf16>
    %cst_24 = arith.constant dense<0.000000e+00> : vector<8x64xf32>
    %63 = tpu.matmul %61, %62, %cst_24 {dimension_numbers = #tpu.dot_dimension_numbers<[1], [0], [0], [1], [0, 0, 1, 1], [], []>} : vector<8x64xbf16>, vector<64x64xbf16>, vector<8x64xf32> -> vector<8x64xf32>
    %c0_25 = arith.constant 0 : index
    %c0_26 = arith.constant 0 : index
    %64 = vector.load %arg8[%c0_25, %c0_26] : memref<1x64xf32, #tpu.memory_space<vmem>>, vector<1x64xf32>
    %65 = vector.broadcast %64 : vector<1x64xf32> to vector<8x64xf32>
    %66 = arith.addf %63, %65 : vector<8x64xf32>
    %67 = arith.addf %0, %66 : vector<8x64xf32>
    %c0_27 = arith.constant 0 : index
    %c0_28 = arith.constant 0 : index
    %68 = vector.load %arg9[%c0_27, %c0_28] : memref<1x64xf32, #tpu.memory_space<vmem>>, vector<1x64xf32>
    %c0_29 = arith.constant 0 : index
    %c0_30 = arith.constant 0 : index
    %69 = vector.load %arg10[%c0_29, %c0_30] : memref<1x64xf32, #tpu.memory_space<vmem>>, vector<1x64xf32>
    %cst_31 = arith.constant dense<0.000000e+00> : vector<8x64xf32>
    %70 = tpu.matmul %67, %1, %cst_31 {dimension_numbers = #tpu.dot_dimension_numbers<[1], [0], [0], [1], [0, 0, 1, 1], [], []>} : vector<8x64xf32>, vector<64x64xf32>, vector<8x64xf32> -> vector<8x64xf32>
    %71 = arith.subf %67, %70 : vector<8x64xf32>
    %72 = arith.mulf %71, %71 : vector<8x64xf32>
    %cst_32 = arith.constant dense<0.000000e+00> : vector<8x64xf32>
    %73 = tpu.matmul %72, %1, %cst_32 {dimension_numbers = #tpu.dot_dimension_numbers<[1], [0], [0], [1], [0, 0, 1, 1], [], []>} : vector<8x64xf32>, vector<64x64xf32>, vector<8x64xf32> -> vector<8x64xf32>
    %cst_33 = arith.constant 9.99999974E-6 : f32
    %74 = vector.broadcast %cst_33 : f32 to vector<8x64xf32>
    %75 = arith.addf %73, %74 : vector<8x64xf32>
    %76 = math.rsqrt %75 : vector<8x64xf32>
    %77 = arith.mulf %71, %76 : vector<8x64xf32>
    %78 = vector.broadcast %68 : vector<1x64xf32> to vector<8x64xf32>
    %79 = arith.mulf %77, %78 : vector<8x64xf32>
    %80 = vector.broadcast %69 : vector<1x64xf32> to vector<8x64xf32>
    %81 = arith.addf %79, %80 : vector<8x64xf32>
    %82 = arith.truncf %81 : vector<8x64xf32> to vector<8x64xbf16>
    %c0_34 = arith.constant 0 : index
    %c0_35 = arith.constant 0 : index
    %83 = vector.load %arg11[%c0_34, %c0_35] : memref<64x64xbf16, #tpu.memory_space<vmem>>, vector<64x64xbf16>
    %cst_36 = arith.constant dense<0.000000e+00> : vector<8x64xf32>
    %84 = tpu.matmul %82, %83, %cst_36 {dimension_numbers = #tpu.dot_dimension_numbers<[1], [0], [0], [1], [0, 0, 1, 1], [], []>} : vector<8x64xbf16>, vector<64x64xbf16>, vector<8x64xf32> -> vector<8x64xf32>
    %c0_37 = arith.constant 0 : index
    %c0_38 = arith.constant 0 : index
    %85 = vector.load %arg12[%c0_37, %c0_38] : memref<1x64xf32, #tpu.memory_space<vmem>>, vector<1x64xf32>
    %86 = vector.broadcast %85 : vector<1x64xf32> to vector<8x64xf32>
    %87 = arith.addf %84, %86 : vector<8x64xf32>
    %cst_39 = arith.constant 1.702000e+00 : f32
    %88 = vector.broadcast %cst_39 : f32 to vector<8x64xf32>
    %89 = arith.mulf %88, %87 : vector<8x64xf32>
    %90 = arith.negf %89 : vector<8x64xf32>
    %91 = math.exp %90 : vector<8x64xf32>
    %cst_40 = arith.constant 1.000000e+00 : f32
    %92 = vector.broadcast %cst_40 : f32 to vector<8x64xf32>
    %93 = arith.addf %92, %91 : vector<8x64xf32>
    %94 = arith.divf %92, %93 : vector<8x64xf32>
    %95 = arith.mulf %87, %94 : vector<8x64xf32>
    %96 = arith.truncf %95 : vector<8x64xf32> to vector<8x64xbf16>
    %c0_41 = arith.constant 0 : index
    %c0_42 = arith.constant 0 : index
    %97 = vector.load %arg13[%c0_41, %c0_42] : memref<64x64xbf16, #tpu.memory_space<vmem>>, vector<64x64xbf16>
    %cst_43 = arith.constant dense<0.000000e+00> : vector<8x64xf32>
    %98 = tpu.matmul %96, %97, %cst_43 {dimension_numbers = #tpu.dot_dimension_numbers<[1], [0], [0], [1], [0, 0, 1, 1], [], []>} : vector<8x64xbf16>, vector<64x64xbf16>, vector<8x64xf32> -> vector<8x64xf32>
    %c0_44 = arith.constant 0 : index
    %c0_45 = arith.constant 0 : index
    %99 = vector.load %arg14[%c0_44, %c0_45] : memref<1x64xf32, #tpu.memory_space<vmem>>, vector<1x64xf32>
    %100 = vector.broadcast %99 : vector<1x64xf32> to vector<8x64xf32>
    %101 = arith.addf %98, %100 : vector<8x64xf32>
    %102 = arith.addf %67, %101 : vector<8x64xf32>
    %c0_46 = arith.constant 0 : index
    %c0_47 = arith.constant 0 : index
    %103 = vector.load %arg15[%c0_46, %c0_47] : memref<8x64xf32, #tpu.memory_space<vmem>>, vector<8x64xf32>
    tpu.vector_store %arg15[%c0_46, %c0_47], %102 {strides = array<i32>} : memref<8x64xf32, #tpu.memory_space<vmem>>, vector<8x64xf32>,
    return
  }
  func.func @transform_0(%arg0: i32) -> (i32, i32) {
    %c0_i32 = arith.constant 0 : i32
    %c0_i32_0 = arith.constant 0 : i32
    return %c0_i32, %arg0 : i32, i32
  }
  func.func @transform_1(%arg0: i32) -> (i32, i32) {
    %c0_i32 = arith.constant 0 : i32
    %c0_i32_0 = arith.constant 0 : i32
    %c0_i32_1 = arith.constant 0 : i32
    return %c0_i32, %c0_i32_0 : i32, i32
  }
  func.func @transform_2(%arg0: i32) -> (i32, i32) {
    %c0_i32 = arith.constant 0 : i32
    %c0_i32_0 = arith.constant 0 : i32
    %c0_i32_1 = arith.constant 0 : i32
    return %c0_i32, %c0_i32_0 : i32, i32
  }
  func.func @transform_3(%arg0: i32) -> (i32, i32) {
    %c0_i32 = arith.constant 0 : i32
    %c0_i32_0 = arith.constant 0 : i32
    %c0_i32_1 = arith.constant 0 : i32
    return %c0_i32, %c0_i32_0 : i32, i32
  }
  func.func @transform_4(%arg0: i32) -> (i32, i32) {
    %c0_i32 = arith.constant 0 : i32
    %c0_i32_0 = arith.constant 0 : i32
    %c0_i32_1 = arith.constant 0 : i32
    return %c0_i32, %c0_i32_0 : i32, i32
  }
  func.func @transform_5(%arg0: i32) -> (i32, i32) {
    %c0_i32 = arith.constant 0 : i32
    %c0_i32_0 = arith.constant 0 : i32
    %c0_i32_1 = arith.constant 0 : i32
    return %c0_i32, %c0_i32_0 : i32, i32
  }
  func.func @transform_6(%arg0: i32) -> (i32, i32) {
    %c0_i32 = arith.constant 0 : i32
    %c0_i32_0 = arith.constant 0 : i32
    %c0_i32_1 = arith.constant 0 : i32
    return %c0_i32, %c0_i32_0 : i32, i32
  }
  func.func @transform_7(%arg0: i32) -> (i32, i32) {
    %c0_i32 = arith.constant 0 : i32
    %c0_i32_0 = arith.constant 0 : i32
    %c0_i32_1 = arith.constant 0 : i32
    return %c0_i32, %c0_i32_0 : i32, i32
  }
  func.func @transform_8(%arg0: i32) -> (i32, i32) {
    %c0_i32 = arith.constant 0 : i32
    %c0_i32_0 = arith.constant 0 : i32
    %c0_i32_1 = arith.constant 0 : i32
    return %c0_i32, %c0_i32_0 : i32, i32
  }
  func.func @transform_9(%arg0: i32) -> (i32, i32) {
    %c0_i32 = arith.constant 0 : i32
    %c0_i32_0 = arith.constant 0 : i32
    %c0_i32_1 = arith.constant 0 : i32
    return %c0_i32, %c0_i32_0 : i32, i32
  }
  func.func @transform_10(%arg0: i32) -> (i32, i32) {
    %c0_i32 = arith.constant 0 : i32
    %c0_i32_0 = arith.constant 0 : i32
    %c0_i32_1 = arith.constant 0 : i32
    return %c0_i32, %c0_i32_0 : i32, i32
  }
  func.func @transform_11(%arg0: i32) -> (i32, i32) {
    %c0_i32 = arith.constant 0 : i32
    %c0_i32_0 = arith.constant 0 : i32
    %c0_i32_1 = arith.constant 0 : i32
    return %c0_i32, %c0_i32_0 : i32, i32
  }
  func.func @transform_12(%arg0: i32) -> (i32, i32) {
    %c0_i32 = arith.constant 0 : i32
    %c0_i32_0 = arith.constant 0 : i32
    %c0_i32_1 = arith.constant 0 : i32
    return %c0_i32, %c0_i32_0 : i32, i32
  }
  func.func @transform_13(%arg0: i32) -> (i32, i32) {
    %c0_i32 = arith.constant 0 : i32
    %c0_i32_0 = arith.constant 0 : i32
    %c0_i32_1 = arith.constant 0 : i32
    return %c0_i32, %c0_i32_0 : i32, i32
  }
  func.func @transform_14(%arg0: i32) -> (i32, i32) {
    %c0_i32 = arith.constant 0 : i32
    %c0_i32_0 = arith.constant 0 : i32
    return %c0_i32, %arg0 : i32, i32
  }
}

</mosaic_0001>

<llo_original>
// kernel: residual_self_attention_pallas.1
$region0: #{residual_self_attention_pallas.1}
  #allocation0 [shape = 'u32[]', space=smem, size = 0x4, offset = 0x4, fixed_abs, tag = 'smem constant byte address 0x4 - core index']
  #allocation1 [shape = 'u32[144,128]{1,0:T(1,128)}', space=vmem, size = 0x12000, scoped, tag = 'internal scratch']
  %s0 = inlined_call_operand.vmem [shape: f32[8,64], index: 0, kind: input, shape index: {}]
  %s1 = inlined_call_operand.hbm [shape: f32[64,64], index: 1, kind: input, shape index: {}]
  %s2 = inlined_call_operand.vmem [shape: f32[1,64], index: 2, kind: input, shape index: {}]
  %s3 = inlined_call_operand.vmem [shape: f32[1,64], index: 3, kind: input, shape index: {}]
  %s4 = inlined_call_operand.vmem [shape: bf16[64,192], index: 4, kind: input, shape index: {}]
  %s5 = inlined_call_operand.vmem [shape: f32[1,192], index: 5, kind: input, shape index: {}]
  %s6 = inlined_call_operand.hbm [shape: bf16[64,64], index: 6, kind: input, shape index: {}]
  %s7 = inlined_call_operand.vmem [shape: f32[1,64], index: 7, kind: input, shape index: {}]
  %s8 = inlined_call_operand.vmem [shape: f32[1,64], index: 8, kind: input, shape index: {}]
  %s9 = inlined_call_operand.vmem [shape: f32[1,64], index: 9, kind: input, shape index: {}]
  %s10 = inlined_call_operand.hbm [shape: bf16[64,64], index: 10, kind: input, shape index: {}]
  %s11 = inlined_call_operand.vmem [shape: f32[1,64], index: 11, kind: input, shape index: {}]
  %s12 = inlined_call_operand.hbm [shape: bf16[64,64], index: 12, kind: input, shape index: {}]
  %s13 = inlined_call_operand.vmem [shape: f32[1,64], index: 13, kind: input, shape index: {}]
  %s14 = inlined_call_operand.vmem [shape: f32[8,64], index: 14, kind: output, shape index: {}]
  %s15 = sld [smem:[#allocation0]]
  $region82: #{residual_self_attention_pallas.1} parent=0
    _
  %s17 = ssub.s32 1, %s15
  %s18 = scalar_select 0, %s17, %s15
  $region1: #{residual_self_attention_pallas.1} parent=0
    #allocation2 [shape = 'u8[32768]{0}', space=vmem, size = 0x8000, scoped, tag = 'input window, operand 1, single buffered']
    #allocation3 [shape = 's32[1]{0}', space=sflag, size = 0x4, scoped, tag = 'scoped memory for residual_self_attention_pallas.1']
    #allocation4 [shape = 'u8[16384]{0}', space=vmem, size = 0x4000, scoped, tag = 'input window, operand 6, single buffered']
    #allocation5 [shape = 's32[1]{0}', space=sflag, size = 0x4, scoped, tag = 'scoped memory for residual_self_attention_pallas.1']
    #allocation6 [shape = 'u8[16384]{0}', space=vmem, size = 0x4000, scoped, tag = 'input window, operand 10, single buffered']
    #allocation7 [shape = 'u8[16384]{0}', space=vmem, size = 0x4000, scoped, tag = 'input window, operand 12, single buffered']
    #allocation8 [shape = 's32[1]{0}', space=sflag, size = 0x4, scoped, tag = 'scoped memory for residual_self_attention_pallas.1']
    %19 = vsyncpa [#allocation3], 0
    %20 = vsyncpa [#allocation5], 0
    %21 = vsyncpa [#allocation8], 0
    // Predicated region
    $region2: #{residual_self_attention_pallas.1} parent=1 // pred_check
      _
    $region3: #{residual_self_attention_pallas.1} parent=1 // pred_check_branch
      %23 = sbr.rel (0) target = $region5
    $region4: #{residual_self_attention_pallas.1} parent=1 // pred_region
      _
    $region5: #{residual_self_attention_pallas.1} parent=1 // pred_fallthru
      _
    // Predicated region
    $region6: #{residual_self_attention_pallas.1} parent=1 // pred_check
      _
    $region7: #{residual_self_attention_pallas.1} parent=1 // pred_check_branch
      %25 = sbr.rel (0) target = $region9
    $region8: #{residual_self_attention_pallas.1} parent=1 // pred_region
      %s27 = ssub.s32 1024, 1024
      %28 = vsyncadd [#allocation3], %s27
      %s29 = sshll.u32 [#allocation2], 4
      %s30 = int_to_ptr.vmem [resolvable:$true] %s29
      %35 = dma.hbm_to_vmem [thread:$0]  %s1, 1024, %s30, [#allocation3], 128, 128, 8
    $region9: #{residual_self_attention_pallas.1} parent=1 // pred_fallthru
      _
    // Predicated region
    $region10: #{residual_self_attention_pallas.1} parent=1 // pred_check
      _
    $region11: #{residual_self_attention_pallas.1} parent=1 // pred_check_branch
      %37 = sbr.rel (0) target = $region13
    $region12: #{residual_self_attention_pallas.1} parent=1 // pred_region
      _
    $region13: #{residual_self_attention_pallas.1} parent=1 // pred_fallthru
      _
    // Predicated region
    $region14: #{residual_self_attention_pallas.1} parent=1 // pred_check
      _
    $region15: #{residual_self_attention_pallas.1} parent=1 // pred_check_branch
      %39 = sbr.rel (0) target = $region17
    $region16: #{residual_self_attention_pallas.1} parent=1 // pred_region
      _
    $region17: #{residual_self_attention_pallas.1} parent=1 // pred_fallthru
      _
    // Predicated region
    $region18: #{residual_self_attention_pallas.1} parent=1 // pred_check
      _
    $region19: #{residual_self_attention_pallas.1} parent=1 // pred_check_branch
      %41 = sbr.rel (0) target = $region21
    $region20: #{residual_self_attention_pallas.1} parent=1 // pred_region
      _
    $region21: #{residual_self_attention_pallas.1} parent=1 // pred_fallthru
      _
    // Predicated region
    $region22: #{residual_self_attention_pallas.1} parent=1 // pred_check
      _
    $region23: #{residual_self_attention_pallas.1} parent=1 // pred_check_branch
      %43 = sbr.rel (0) target = $region25
    $region24: #{residual_self_attention_pallas.1} parent=1 // pred_region
      _
    $region25: #{residual_self_attention_pallas.1} parent=1 // pred_fallthru
      _
    // Predicated region
    $region26: #{residual_self_attention_pallas.1} parent=1 // pred_check
      _
    $region27: #{residual_self_attention_pallas.1} parent=1 // pred_check_branch
      %45 = sbr.rel (0) target = $region29
    $region28: #{residual_self_attention_pallas.1} parent=1 // pred_region
      %s47 = ssub.s32 512, 512
      %48 = vsyncadd [#allocation5], %s47
      %s49 = sshll.u32 [#allocation4], 4
      %s50 = int_to_ptr.vmem [resolvable:$true] %s49
      %55 = dma.hbm_to_vmem [thread:$0]  %s6, 512, %s50, [#allocation5], 64, 64, 4
    $region29: #{residual_self_attention_pallas.1} parent=1 // pred_fallthru
      _
    // Predicated region
    $region30: #{residual_self_attention_pallas.1} parent=1 // pred_check
      _
    $region31: #{residual_self_attention_pallas.1} parent=1 // pred_check_branch
      %57 = sbr.rel (0) target = $region33
    $region32: #{residual_self_attention_pallas.1} parent=1 // pred_region
      _
    $region33: #{residual_self_attention_pallas.1} parent=1 // pred_fallthru
      _
    // Predicated region
    $region34: #{residual_self_attention_pallas.1} parent=1 // pred_check
      _
    $region35: #{residual_self_attention_pallas.1} parent=1 // pred_check_branch
      %59 = sbr.rel (0) target = $region37
    $region36: #{residual_self_attention_pallas.1} parent=1 // pred_region
      _
    $region37: #{residual_self_attention_pallas.1} parent=1 // pred_fallthru
      _
    // Predicated region
    $region38: #{residual_self_attention_pallas.1} parent=1 // pred_check
      _
    $region39: #{residual_self_attention_pallas.1} parent=1 // pred_check_branch
      %61 = sbr.rel (0) target = $region41
    $region40: #{residual_self_attention_pallas.1} parent=1 // pred_region
      _
    $region41: #{residual_self_attention_pallas.1} parent=1 // pred_fallthru
      _
    // Predicated region
    $region42: #{residual_self_attention_pallas.1} parent=1 // pred_check
      _
    $region43: #{residual_self_attention_pallas.1} parent=1 // pred_check_branch
      %63 = sbr.rel (0) target = $region45
    $region44: #{residual_self_attention_pallas.1} parent=1 // pred_region
      %s65 = ssub.s32 512, 512
      %66 = vsyncadd [#allocation5], %s65
      %s67 = sshll.u32 [#allocation6], 4
      %s68 = int_to_ptr.vmem [resolvable:$true] %s67
      %73 = dma.hbm_to_vmem [thread:$0]  %s10, 512, %s68, [#allocation5], 64, 64, 4
    $region45: #{residual_self_attention_pallas.1} parent=1 // pred_fallthru
      _
    // Predicated region
    $region46: #{residual_self_attention_pallas.1} parent=1 // pred_check
      _
    $region47: #{residual_self_attention_pallas.1} parent=1 // pred_check_branch
      %75 = sbr.rel (0) target = $region49
    $region48: #{residual_self_attention_pallas.1} parent=1 // pred_region
      _
    $region49: #{residual_self_attention_pallas.1} parent=1 // pred_fallthru
      _
    // Predicated region
    $region50: #{residual_self_attention_pallas.1} parent=1 // pred_check
      _
    $region51: #{residual_self_attention_pallas.1} parent=1 // pred_check_branch
      %77 = sbr.rel (0) target = $region53
    $region52: #{residual_self_attention_pallas.1} parent=1 // pred_region
      %s79 = ssub.s32 512, 512
      %80 = vsyncadd [#allocation8], %s79
      %s81 = sshll.u32 [#allocation7], 4
      %s82 = int_to_ptr.vmem [resolvable:$true] %s81
      %87 = dma.hbm_to_vmem [thread:$0]  %s12, 512, %s82, [#allocation8], 64, 64, 4
    $region53: #{residual_self_attention_pallas.1} parent=1 // pred_fallthru
      _
    // Predicated region
    $region54: #{residual_self_attention_pallas.1} parent=1 // pred_check
      _
    $region55: #{residual_self_attention_pallas.1} parent=1 // pred_check_branch
      %89 = sbr.rel (0) target = $region57
    $region56: #{residual_self_attention_pallas.1} parent=1 // pred_region
      _
    $region57: #{residual_self_attention_pallas.1} parent=1 // pred_fallthru
      _
    // Predicated region
    $region58: #{residual_self_attention_pallas.1} parent=1 // pred_check
      _
    $region59: #{residual_self_attention_pallas.1} parent=1 // pred_check_branch
      %91 = sbr.rel (0) target = $region61
    $region60: #{residual_self_attention_pallas.1} parent=1 // pred_region
      %92 = dma.done [#allocation3], 1024
    $region61: #{residual_self_attention_pallas.1} parent=1 // pred_fallthru
      _
    // Predicated region
    $region62: #{residual_self_attention_pallas.1} parent=1 // pred_check
      _
    $region63: #{residual_self_attention_pallas.1} parent=1 // pred_check_branch
      %94 = sbr.rel (0) target = $region65
    $region64: #{residual_self_attention_pallas.1} parent=1 // pred_region
      %95 = dma.done [#allocation5], 512
    $region65: #{residual_self_attention_pallas.1} parent=1 // pred_fallthru
      _
    // Predicated region
    $region66: #{residual_self_attention_pallas.1} parent=1 // pred_check
      _
    $region67: #{residual_self_attention_pallas.1} parent=1 // pred_check_branch
      %97 = sbr.rel (0) target = $region69
    $region68: #{residual_self_attention_pallas.1} parent=1 // pred_region
      %98 = dma.done [#allocation5], 512
    $region69: #{residual_self_attention_pallas.1} parent=1 // pred_fallthru
      _
    // Predicated region
    $region70: #{residual_self_attention_pallas.1} parent=1 // pred_check
      _
    $region71: #{residual_self_attention_pallas.1} parent=1 // pred_check_branch
      %100 = sbr.rel (0) target = $region73
    $region72: #{residual_self_attention_pallas.1} parent=1 // pred_region
      %101 = dma.done [#allocation8], 512
    $region73: #{residual_self_attention_pallas.1} parent=1 // pred_fallthru
      _
    %v103 = vld [vmem:[%s0] sm:$0xff]
    %v104 = vld [vmem:[#allocation2] sm:$0xff]
    %v105 = vld [vmem:[#allocation2 + $0x8] sm:$0xff]
    %v106 = vld [vmem:[#allocation2 + $0x10] sm:$0xff]
    %v107 = vld [vmem:[#allocation2 + $0x18] sm:$0xff]
    %v108 = vld [vmem:[#allocation2 + $0x20] sm:$0xff]
    %v109 = vld [vmem:[#allocation2 + $0x28] sm:$0xff]
    %v110 = vld [vmem:[#allocation2 + $0x30] sm:$0xff]
    %v111 = vld [vmem:[#allocation2 + $0x38] sm:$0xff]
    %v112 = vld [vmem:[%s2] sm:$0x1]
    %v113 = vld [vmem:[%s3] sm:$0x1]
    %vm114 = vcmask 523264
    %v116 = vsel %vm114, %v103, 0
    %118 = vmatprep.subr.mxu0 0.0
    %119 = vmatpush1.msra.mxu0 %v104
    %120 = vmatprep.subr.mxu0 0.0
    %121 = vmatpush1.msra.mxu0 %v105
    %122 = vmatprep.subr.mxu0 0.0
    %123 = vmatpush1.msra.mxu0 %v106
    %124 = vmatprep.subr.mxu0 0.0
    %125 = vmatpush1.msra.mxu0 %v107
    %126 = vmatprep.subr.mxu0 0.0
    %127 = vmatpush1.msra.mxu0 %v108
    %128 = vmatprep.subr.mxu0 0.0
    %129 = vmatpush1.msra.mxu0 %v109
    %130 = vmatprep.subr.mxu0 0.0
    %131 = vmatpush1.msra.mxu0 %v110
    %132 = vmatprep.subr.mxu0 0.0
    %133 = vmatpush1.msra.mxu0 %v111
    %134 = vmatprep.subr.mxu0 0.0
    %135 = vmatpush1.msra.mxu0 0.0
    %136 = vmatprep.subr.mxu0 0.0
    %137 = vmatpush1.msra.mxu0 0.0
    %138 = vmatprep.subr.mxu0 0.0
    %139 = vmatpush1.msra.mxu0 0.0
    %140 = vmatprep.subr.mxu0 0.0
    %141 = vmatpush1.msra.mxu0 0.0
    %142 = vmatprep.subr.mxu0 0.0
    %143 = vmatpush1.msra.mxu0 0.0
    %144 = vmatprep.subr.mxu0 0.0
    %145 = vmatpush1.msra.mxu0 0.0
    %146 = vmatprep.subr.mxu0 0.0
    %147 = vmatpush1.msra.mxu0 0.0
    %148 = vmatprep.subr.mxu0 0.0
    %149 = vmatpush1.msra.mxu0 0.0
    %150 = vmatprep.subr.mxu0 0.0
    %151 = vmatpush1.msra.mxu0 0.0
    %152 = vmatprep.subr.mxu0 0.0
    %153 = vmatpush1.msra.mxu0 0.0
    %154 = vmatprep.subr.mxu0 0.0
    %155 = vmatpush1.msra.mxu0 0.0
    %156 = vmatprep.subr.mxu0 0.0
    %157 = vmatpush1.msra.mxu0 0.0
    %158 = vmatprep.subr.mxu0 0.0
    %159 = vmatpush1.msra.mxu0 0.0
    %160 = vmatprep.subr.mxu0 0.0
    %161 = vmatpush1.msra.mxu0 0.0
    %162 = vmatprep.subr.mxu0 0.0
    %163 = vmatpush1.msra.mxu0 0.0
    %164 = vmatprep.subr.mxu0 0.0
    %165 = vmatpush1.msra.mxu0 0.0
    %166 = vmatprep.subr.mxu0 0.0
    %167 = vmatpush1.msra.mxu0 0.0
    %168 = vmatprep.subr.mxu0 0.0
    %169 = vmatpush1.msra.mxu0 0.0
    %170 = vmatprep.subr.mxu0 0.0
    %171 = vmatpush1.msra.mxu0 0.0
    %172 = vmatprep.subr.mxu0 0.0
    %173 = vmatpush1.msra.mxu0 0.0
    %174 = vmatprep.subr.mxu0 0.0
    %175 = vmatpush1.msra.mxu0 0.0
    %176 = vmatprep.subr.mxu0 0.0
    %177 = vmatpush1.msra.mxu0 0.0
    %178 = vmatprep.subr.mxu0 0.0
    %179 = vmatpush1.msra.mxu0 0.0
    %180 = vmatprep.subr.mxu0 0.0
    %181 = vmatpush1.msra.mxu0 0.0
    %182 = vmatprep.mubr.f32.mxu0 0.0
    %183 = vmatmul.mubr.f32.gmra.mrb[0].mxu0 %v116
    %v184 = vpop.f32.mrb[0].mxu0
    %v185 = vadd.f32 0.0, %v184
    %v186 = vpop.f32.mrb[0].mxu0
    %187 = vdwg.mxu0
    %v188 = vsub.f32 %v103, %v185
    %v189 = vmul.f32 %v188, %v188
    %v191 = vsel %vm114, %v189, 0
    %193 = vmatprep.subr.mxu0 0.0
    %194 = vmatpush1.msra.mxu0 %v104
    %195 = vmatprep.subr.mxu0 0.0
    %196 = vmatpush1.msra.mxu0 %v105
    %197 = vmatprep.subr.mxu0 0.0
    %198 = vmatpush1.msra.mxu0 %v106
    %199 = vmatprep.subr.mxu0 0.0
    %200 = vmatpush1.msra.mxu0 %v107
    %201 = vmatprep.subr.mxu0 0.0
    %202 = vmatpush1.msra.mxu0 %v108
    %203 = vmatprep.subr.mxu0 0.0
    %204 = vmatpush1.msra.mxu0 %v109
    %205 = vmatprep.subr.mxu0 0.0
    %206 = vmatpush1.msra.mxu0 %v110
    %207 = vmatprep.subr.mxu0 0.0
    %208 = vmatpush1.msra.mxu0 %v111
    %209 = vmatprep.subr.mxu0 0.0
    %210 = vmatpush1.msra.mxu0 0.0
    %211 = vmatprep.subr.mxu0 0.0
    %212 = vmatpush1.msra.mxu0 0.0
    %213 = vmatprep.subr.mxu0 0.0
    %214 = vmatpush1.msra.mxu0 0.0
    %215 = vmatprep.subr.mxu0 0.0
    %216 = vmatpush1.msra.mxu0 0.0
    %217 = vmatprep.subr.mxu0 0.0
    %218 = vmatpush1.msra.mxu0 0.0
    %219 = vmatprep.subr.mxu0 0.0
    %220 = vmatpush1.msra.mxu0 0.0
    %221 = vmatprep.subr.mxu0 0.0
    %222 = vmatpush1.msra.mxu0 0.0
    %223 = vmatprep.subr.mxu0 0.0
    %224 = vmatpush1.msra.mxu0 0.0
    %225 = vmatprep.subr.mxu0 0.0
    %226 = vmatpush1.msra.mxu0 0.0
    %227 = vmatprep.subr.mxu0 0.0
    %228 = vmatpush1.msra.mxu0 0.0
    %229 = vmatprep.subr.mxu0 0.0
    %230 = vmatpush1.msra.mxu0 0.0
    %231 = vmatprep.subr.mxu0 0.0
    %232 = vmatpush1.msra.mxu0 0.0
    %233 = vmatprep.subr.mxu0 0.0
    %234 = vmatpush1.msra.mxu0 0.0
    %235 = vmatprep.subr.mxu0 0.0
    %236 = vmatpush1.msra.mxu0 0.0
    %237 = vmatprep.subr.mxu0 0.0
    %238 = vmatpush1.msra.mxu0 0.0
    %239 = vmatprep.subr.mxu0 0.0
    %240 = vmatpush1.msra.mxu0 0.0
    %241 = vmatprep.subr.mxu0 0.0
    %242 = vmatpush1.msra.mxu0 0.0
    %243 = vmatprep.subr.mxu0 0.0
    %244 = vmatpush1.msra.mxu0 0.0
    %245 = vmatprep.subr.mxu0 0.0
    %246 = vmatpush1.msra.mxu0 0.0
    %247 = vmatprep.subr.mxu0 0.0
    %248 = vmatpush1.msra.mxu0 0.0
    %249 = vmatprep.subr.mxu0 0.0
    %250 = vmatpush1.msra.mxu0 0.0
    %251 = vmatprep.subr.mxu0 0.0
    %252 = vmatpush1.msra.mxu0 0.0
    %253 = vmatprep.subr.mxu0 0.0
    %254 = vmatpush1.msra.mxu0 0.0
    %255 = vmatprep.subr.mxu0 0.0
    %256 = vmatpush1.msra.mxu0 0.0
    %257 = vmatprep.mubr.f32.mxu0 0.0
    %258 = vmatmul.mubr.f32.gmra.mrb[0].mxu0 %v191
    %v259 = vpop.f32.mrb[0].mxu0
    %v260 = vadd.f32 1e-05, %v259
    %v261 = vpop.f32.mrb[0].mxu0
    %262 = vdwg.mxu0
    %v263 = vrsqrt.pop %v260
    %v264 = vmul.f32 %v188, %v263
    %v266 = vlaneseq
    %v267 = vshrl.u32 %v266, 7
    %v268 = vsub.s32 0, %v267
    %v269 = vrot.slane %v112, %v268
    %v271 = vmul.f32 %v264, %v269
    %v273 = vlaneseq
    %v274 = vshrl.u32 %v273, 7
    %v275 = vsub.s32 0, %v274
    %v276 = vrot.slane %v113, %v275
    %v278 = vadd.f32 %v271, %v276
    %v279 = vpack.c.bf16 %v278, %v278
    %v280 = vld [vmem:[%s4] sm:$0xff]
    %v281 = vld [vmem:[%s4 + $0x8] sm:$0xff]
    %v282 = vld [vmem:[%s4 + $0x10] sm:$0xff]
    %v283 = vld [vmem:[%s4 + $0x18] sm:$0xff]
    %v284 = vld [vmem:[%s4 + $0x20] sm:$0xff]
    %v285 = vld [vmem:[%s4 + $0x28] sm:$0xff]
    %v286 = vld [vmem:[%s4 + $0x30] sm:$0xff]
    %v287 = vld [vmem:[%s4 + $0x38] sm:$0xff]
    %v288 = vld [vmem:[%s5] sm:$0x3]
    %v290 = vlaneseq
    %v291 = vshrl.u32 %v290, 7
    %v292 = vsub.s32 0, %v291
    %v293 = vrot.slane %v288, %v292
    %v294 = vlaneseq
    %v295 = vshrl.u32 %v294, 7
    %v296 = vsub.s32 1, %v295
    %v297 = vrot.slane %v288, %v296
    %v308 = vunpack.c.l.b16 %v280
    %v309 = vunpack.c.h.b16 %v280
    %v310 = vunpack.c.l.b16 %v281
    %v311 = vunpack.c.h.b16 %v281
    %v312 = vunpack.c.l.b16 %v282
    %v313 = vunpack.c.h.b16 %v282
    %v314 = vunpack.c.l.b16 %v283
    %v315 = vunpack.c.h.b16 %v283
    %v316 = vunpack.c.l.b16 %v284
    %v317 = vunpack.c.h.b16 %v284
    %v318 = vunpack.c.l.b16 %v285
    %v319 = vunpack.c.h.b16 %v285
    %v320 = vunpack.c.l.b16 %v286
    %v321 = vunpack.c.h.b16 %v286
    %v322 = vunpack.c.l.b16 %v287
    %v323 = vunpack.c.h.b16 %v287
    %v324 = vpack.c.b16 %v310, %v308
    %v325 = vpack.c.b16 %v311, %v309
    %v326 = vpack.c.b16 %v314, %v312
    %v327 = vpack.c.b16 %v315, %v313
    %v328 = vpack.c.b16 %v318, %v316
    %v329 = vpack.c.b16 %v319, %v317
    %v330 = vpack.c.b16 %v322, %v320
    %v331 = vpack.c.b16 %v323, %v321
    %v341 = vsel %vm114, %v279, 0
    %343 = vmatprep.subr.bf16.mxu0 %v325
    %344 = vmatpush1.bf16.msra.mxu0 %v324
    %345 = vmatprep.subr.bf16.mxu0 %v327
    %346 = vmatpush1.bf16.msra.mxu0 %v326
    %347 = vmatprep.subr.bf16.mxu0 %v329
    %348 = vmatpush1.bf16.msra.mxu0 %v328
    %349 = vmatprep.subr.bf16.mxu0 %v331
    %350 = vmatpush1.bf16.msra.mxu0 %v330
    %351 = vmatprep.subr.bf16.mxu0 0
    %352 = vmatpush1.bf16.msra.mxu0 0
    %353 = vmatprep.subr.bf16.mxu0 0
    %354 = vmatpush1.bf16.msra.mxu0 0
    %355 = vmatprep.subr.bf16.mxu0 0
    %356 = vmatpush1.bf16.msra.mxu0 0
    %357 = vmatprep.subr.bf16.mxu0 0
    %358 = vmatpush1.bf16.msra.mxu0 0
    %359 = vmatprep.subr.bf16.mxu0 0
    %360 = vmatpush1.bf16.msra.mxu0 0
    %361 = vmatprep.subr.bf16.mxu0 0
    %362 = vmatpush1.bf16.msra.mxu0 0
    %363 = vmatprep.subr.bf16.mxu0 0
    %364 = vmatpush1.bf16.msra.mxu0 0
    %365 = vmatprep.subr.bf16.mxu0 0
    %366 = vmatpush1.bf16.msra.mxu0 0
    %367 = vmatprep.subr.bf16.mxu0 0
    %368 = vmatpush1.bf16.msra.mxu0 0
    %369 = vmatprep.subr.bf16.mxu0 0
    %370 = vmatpush1.bf16.msra.mxu0 0
    %371 = vmatprep.subr.bf16.mxu0 0
    %372 = vmatpush1.bf16.msra.mxu0 0
    %373 = vmatprep.subr.bf16.mxu0 0
    %374 = vmatpush1.bf16.msra.mxu0 0
    %375 = vmatprep.mubr.bf16.mxu0 0
    %376 = vmatmul.mubr.bf16.gmra.mrb[0].mxu0 %v341
    %v377 = vpop.f32.mrb[0].mxu0
    %v378 = vadd.f32 %v293, %v377
    %v379 = vpop.f32.mrb[0].mxu0
    %v380 = vadd.f32 %v297, %v379
    %v381 = vpop.f32.mrb[0].mxu0
    %v382 = vpop.f32.mrb[0].mxu0
    %383 = vdwg.mxu0
    %v384 = vpack.c.bf16 %v378, %v378
    %v385 = vpack.c.bf16 %v380, %v380
    %387 = vrot.lane.b32.xlu0 %v384, 64
    %v388 = vpop.permute.xlu0 %387
    %vm389 = vcmask 261120
    %v391 = vsel %vm389, %v384, 0
    %v394 = vsel %vm389, %v388, 0
    %396 = vmatprep.subr.bf16.mxu0 0
    %397 = vmatpush1.bf16.xpose.msra.mxu0 %v394
    %398 = vmatprep.subr.bf16.mxu0 0
    %399 = vmatpush1.bf16.xpose.msra.mxu0 0
    %400 = vmatprep.subr.bf16.mxu0 0
    %401 = vmatpush1.bf16.xpose.msra.mxu0 0
    %402 = vmatprep.subr.bf16.mxu0 0
    %403 = vmatpush1.bf16.xpose.msra.mxu0 0
    %404 = vmatprep.subr.bf16.mxu0 0
    %405 = vmatpush1.bf16.xpose.msra.mxu0 0
    %406 = vmatprep.subr.bf16.mxu0 0
    %407 = vmatpush1.bf16.xpose.msra.mxu0 0
    %408 = vmatprep.subr.bf16.mxu0 0
    %409 = vmatpush1.bf16.xpose.msra.mxu0 0
    %410 = vmatprep.subr.bf16.mxu0 0
    %411 = vmatpush1.bf16.xpose.msra.mxu0 0
    %412 = vmatprep.subr.bf16.mxu0 0
    %413 = vmatpush1.bf16.xpose.msra.mxu0 0
    %414 = vmatprep.subr.bf16.mxu0 0
    %415 = vmatpush1.bf16.xpose.msra.mxu0 0
    %416 = vmatprep.subr.bf16.mxu0 0
    %417 = vmatpush1.bf16.xpose.msra.mxu0 0
    %418 = vmatprep.subr.bf16.mxu0 0
    %419 = vmatpush1.bf16.xpose.msra.mxu0 0
    %420 = vmatprep.subr.bf16.mxu0 0
    %421 = vmatpush1.bf16.xpose.msra.mxu0 0
    %422 = vmatprep.subr.bf16.mxu0 0
    %423 = vmatpush1.bf16.xpose.msra.mxu0 0
    %424 = vmatprep.subr.bf16.mxu0 0
    %425 = vmatpush1.bf16.xpose.msra.mxu0 0
    %426 = vmatprep.subr.bf16.mxu0 0
    %427 = vmatpush1.bf16.xpose.msra.mxu0 0
    %428 = vmatprep.mubr.bf16.mxu0 0
    %429 = vmatmul.mubr.bf16.gmra.mrb[0].mxu0 %v391
    %v430 = vpop.f32.mrb[0].mxu0
    %v431 = vadd.f32 0.0, %v430
    %v432 = vpop.f32.mrb[0].mxu0
    %v433 = vpop.f32.mrb[0].mxu0
    %v434 = vpop.f32.mrb[0].mxu0
    %435 = vdwg.mxu0
    %vm436 = vcmask 64512
    %v437 = vsel %vm436, %v431, -inf
    %438 = vmax.xlane.f32.xlu0 %v437
    %v439 = vpop.xlane.xlu0 %438
    %v440 = vsub.f32 %v431, %v439
    %v441 = vmul.f32 %v440, 1.442695
    %v442 = vpow.pop %v441
    %v443 = vsel %vm436, %v442, 0.0
    %444 = vadd.xlane.f32.xlu0 %v443
    %v445 = vpop.xlane.xlu0 %444
    %v446 = vrcp.pop %v445
    %v447 = vmul.f32 %v442, %v446
    %v448 = vpack.c.bf16 %v447, %v447
    %v450 = vsel %vm436, %v448, 0
    %vm452 = vcmask 1043456
    %v454 = vsel %vm452, %v385, 0
    %456 = vmatprep.subr.bf16.mxu0 0
    %457 = vmatpush1.bf16.msra.mxu0 %v454
    %458 = vmatprep.subr.bf16.mxu0 0
    %459 = vmatpush1.bf16.msra.mxu0 0
    %460 = vmatprep.subr.bf16.mxu0 0
    %461 = vmatpush1.bf16.msra.mxu0 0
    %462 = vmatprep.subr.bf16.mxu0 0
    %463 = vmatpush1.bf16.msra.mxu0 0
    %464 = vmatprep.subr.bf16.mxu0 0
    %465 = vmatpush1.bf16.msra.mxu0 0
    %466 = vmatprep.subr.bf16.mxu0 0
    %467 = vmatpush1.bf16.msra.mxu0 0
    %468 = vmatprep.subr.bf16.mxu0 0
    %469 = vmatpush1.bf16.msra.mxu0 0
    %470 = vmatprep.subr.bf16.mxu0 0
    %471 = vmatpush1.bf16.msra.mxu0 0
    %472 = vmatprep.subr.bf16.mxu0 0
    %473 = vmatpush1.bf16.msra.mxu0 0
    %474 = vmatprep.subr.bf16.mxu0 0
    %475 = vmatpush1.bf16.msra.mxu0 0
    %476 = vmatprep.subr.bf16.mxu0 0
    %477 = vmatpush1.bf16.msra.mxu0 0
    %478 = vmatprep.subr.bf16.mxu0 0
    %479 = vmatpush1.bf16.msra.mxu0 0
    %480 = vmatprep.subr.bf16.mxu0 0
    %481 = vmatpush1.bf16.msra.mxu0 0
    %482 = vmatprep.subr.bf16.mxu0 0
    %483 = vmatpush1.bf16.msra.mxu0 0
    %484 = vmatprep.subr.bf16.mxu0 0
    %485 = vmatpush1.bf16.msra.mxu0 0
    %486 = vmatprep.subr.bf16.mxu0 0
    %487 = vmatpush1.bf16.msra.mxu0 0
    %488 = vmatprep.mubr.bf16.mxu0 0
    %489 = vmatmul.mubr.bf16.gmra.mrb[0].mxu0 %v450
    %v490 = vpop.f32.mrb[0].mxu0
    %v491 = vadd.f32 0.0, %v490
    %v492 = vpop.f32.mrb[0].mxu0
    %v493 = vpop.f32.mrb[0].mxu0
    %v494 = vpop.f32.mrb[0].mxu0
    %495 = vdwg.mxu0
    %496 = vrot.lane.b32.xlu0 %v384, 96
    %v497 = vpop.permute.xlu0 %496
    %498 = vrot.lane.b32.xlu0 %v384, 32
    %v499 = vpop.permute.xlu0 %498
    %v501 = vsel %vm389, %v497, 0
    %v504 = vsel %vm389, %v499, 0
    %506 = vmatprep.subr.bf16.mxu0 0
    %507 = vmatpush1.bf16.xpose.msra.mxu0 %v504
    %508 = vmatprep.subr.bf16.mxu0 0
    %509 = vmatpush1.bf16.xpose.msra.mxu0 0
    %510 = vmatprep.subr.bf16.mxu0 0
    %511 = vmatpush1.bf16.xpose.msra.mxu0 0
    %512 = vmatprep.subr.bf16.mxu0 0
    %513 = vmatpush1.bf16.xpose.msra.mxu0 0
    %514 = vmatprep.subr.bf16.mxu0 0
    %515 = vmatpush1.bf16.xpose.msra.mxu0 0
    %516 = vmatprep.subr.bf16.mxu0 0
    %517 = vmatpush1.bf16.xpose.msra.mxu0 0
    %518 = vmatprep.subr.bf16.mxu0 0
    %519 = vmatpush1.bf16.xpose.msra.mxu0 0
    %520 = vmatprep.subr.bf16.mxu0 0
    %521 = vmatpush1.bf16.xpose.msra.mxu0 0
    %522 = vmatprep.subr.bf16.mxu0 0
    %523 = vmatpush1.bf16.xpose.msra.mxu0 0
    %524 = vmatprep.subr.bf16.mxu0 0
    %525 = vmatpush1.bf16.xpose.msra.mxu0 0
    %526 = vmatprep.subr.bf16.mxu0 0
    %527 = vmatpush1.bf16.xpose.msra.mxu0 0
    %528 = vmatprep.subr.bf16.mxu0 0
    %529 = vmatpush1.bf16.xpose.msra.mxu0 0
    %530 = vmatprep.subr.bf16.mxu0 0
    %531 = vmatpush1.bf16.xpose.msra.mxu0 0
    %532 = vmatprep.subr.bf16.mxu0 0
    %533 = vmatpush1.bf16.xpose.msra.mxu0 0
    %534 = vmatprep.subr.bf16.mxu0 0
    %535 = vmatpush1.bf16.xpose.msra.mxu0 0
    %536 = vmatprep.subr.bf16.mxu0 0
    %537 = vmatpush1.bf16.xpose.msra.mxu0 0
    %538 = vmatprep.mubr.bf16.mxu0 0
    %539 = vmatmul.mubr.bf16.gmra.mrb[0].mxu0 %v501
    %v540 = vpop.f32.mrb[0].mxu0
    %v541 = vadd.f32 0.0, %v540
    %v542 = vpop.f32.mrb[0].mxu0
    %v543 = vpop.f32.mrb[0].mxu0
    %v544 = vpop.f32.mrb[0].mxu0
    %545 = vdwg.mxu0
    %v546 = vsel %vm436, %v541, -inf
    %547 = vmax.xlane.f32.xlu0 %v546
    %v548 = vpop.xlane.xlu0 %547
    %v549 = vsub.f32 %v541, %v548
    %v550 = vmul.f32 %v549, 1.442695
    %v551 = vpow.pop %v550
    %v552 = vsel %vm436, %v551, 0.0
    %553 = vadd.xlane.f32.xlu0 %v552
    %v554 = vpop.xlane.xlu0 %553
    %v555 = vrcp.pop %v554
    %v556 = vmul.f32 %v551, %v555
    %v557 = vpack.c.bf16 %v556, %v556
    %559 = vrot.lane.b32.xlu0 %v385, 96
    %v560 = vpop.permute.xlu0 %559
    %v562 = vsel %vm436, %v557, 0
    %v565 = vsel %vm452, %v560, 0
    %567 = vmatprep.subr.bf16.mxu0 0
    %568 = vmatpush1.bf16.msra.mxu0 %v565
    %569 = vmatprep.subr.bf16.mxu0 0
    %570 = vmatpush1.bf16.msra.mxu0 0
    %571 = vmatprep.subr.bf16.mxu0 0
    %572 = vmatpush1.bf16.msra.mxu0 0
    %573 = vmatprep.subr.bf16.mxu0 0
    %574 = vmatpush1.bf16.msra.mxu0 0
    %575 = vmatprep.subr.bf16.mxu0 0
    %576 = vmatpush1.bf16.msra.mxu0 0
    %577 = vmatprep.subr.bf16.mxu0 0
    %578 = vmatpush1.bf16.msra.mxu0 0
    %579 = vmatprep.subr.bf16.mxu0 0
    %580 = vmatpush1.bf16.msra.mxu0 0
    %581 = vmatprep.subr.bf16.mxu0 0
    %582 = vmatpush1.bf16.msra.mxu0 0
    %583 = vmatprep.subr.bf16.mxu0 0
    %584 = vmatpush1.bf16.msra.mxu0 0
    %585 = vmatprep.subr.bf16.mxu0 0
    %586 = vmatpush1.bf16.msra.mxu0 0
    %587 = vmatprep.subr.bf16.mxu0 0
    %588 = vmatpush1.bf16.msra.mxu0 0
    %589 = vmatprep.subr.bf16.mxu0 0
    %590 = vmatpush1.bf16.msra.mxu0 0
    %591 = vmatprep.subr.bf16.mxu0 0
    %592 = vmatpush1.bf16.msra.mxu0 0
    %593 = vmatprep.subr.bf16.mxu0 0
    %594 = vmatpush1.bf16.msra.mxu0 0
    %595 = vmatprep.subr.bf16.mxu0 0
    %596 = vmatpush1.bf16.msra.mxu0 0
    %597 = vmatprep.subr.bf16.mxu0 0
    %598 = vmatpush1.bf16.msra.mxu0 0
    %599 = vmatprep.mubr.bf16.mxu0 0
    %600 = vmatmul.mubr.bf16.gmra.mrb[0].mxu0 %v562
    %v601 = vpop.f32.mrb[0].mxu0
    %v602 = vadd.f32 0.0, %v601
    %v603 = vpop.f32.mrb[0].mxu0
    %v604 = vpop.f32.mrb[0].mxu0
    %v605 = vpop.f32.mrb[0].mxu0
    %606 = vdwg.mxu0
    %608 = vrot.lane.b32.xlu0 %v602, 32
    %v609 = vpop.permute.xlu0 %608
    %v611 = vsel %vm389, %v491, %v609
    %v612 = vpack.c.bf16 %v611, %v611
    %v613 = vld [vmem:[#allocation4] sm:$0xf]
    %v614 = vld [vmem:[#allocation4 + $0x4] sm:$0xf]
    %v615 = vld [vmem:[#allocation4 + $0x8] sm:$0xf]
    %v616 = vld [vmem:[#allocation4 + $0xc] sm:$0xf]
    %v617 = vld [vmem:[#allocation4 + $0x10] sm:$0xf]
    %v618 = vld [vmem:[#allocation4 + $0x14] sm:$0xf]
    %v619 = vld [vmem:[#allocation4 + $0x18] sm:$0xf]
    %v620 = vld [vmem:[#allocation4 + $0x1c] sm:$0xf]
    %v621 = vld [vmem:[%s7] sm:$0x1]
    %v623 = vlaneseq
    %v624 = vshrl.u32 %v623, 7
    %v625 = vsub.s32 0, %v624
    %v626 = vrot.slane %v621, %v625
    %v636 = vunpack.c.l.b16 %v613
    %v637 = vunpack.c.l.b16 %v614
    %v638 = vunpack.c.l.b16 %v615
    %v639 = vunpack.c.l.b16 %v616
    %v640 = vunpack.c.l.b16 %v617
    %v641 = vunpack.c.l.b16 %v618
    %v642 = vunpack.c.l.b16 %v619
    %v643 = vunpack.c.l.b16 %v620
    %v644 = vpack.c.b16 %v637, %v636
    %v645 = vpack.c.b16 %v639, %v638
    %v646 = vpack.c.b16 %v641, %v640
    %v647 = vpack.c.b16 %v643, %v642
    %v653 = vsel %vm114, %v612, 0
    %655 = vmatprep.subr.bf16.mxu0 0
    %656 = vmatpush1.bf16.msra.mxu0 %v644
    %657 = vmatprep.subr.bf16.mxu0 0
    %658 = vmatpush1.bf16.msra.mxu0 %v645
    %659 = vmatprep.subr.bf16.mxu0 0
    %660 = vmatpush1.bf16.msra.mxu0 %v646
    %661 = vmatprep.subr.bf16.mxu0 0
    %662 = vmatpush1.bf16.msra.mxu0 %v647
    %663 = vmatprep.subr.bf16.mxu0 0
    %664 = vmatpush1.bf16.msra.mxu0 0
    %665 = vmatprep.subr.bf16.mxu0 0
    %666 = vmatpush1.bf16.msra.mxu0 0
    %667 = vmatprep.subr.bf16.mxu0 0
    %668 = vmatpush1.bf16.msra.mxu0 0
    %669 = vmatprep.subr.bf16.mxu0 0
    %670 = vmatpush1.bf16.msra.mxu0 0
    %671 = vmatprep.subr.bf16.mxu0 0
    %672 = vmatpush1.bf16.msra.mxu0 0
    %673 = vmatprep.subr.bf16.mxu0 0
    %674 = vmatpush1.bf16.msra.mxu0 0
    %675 = vmatprep.subr.bf16.mxu0 0
    %676 = vmatpush1.bf16.msra.mxu0 0
    %677 = vmatprep.subr.bf16.mxu0 0
    %678 = vmatpush1.bf16.msra.mxu0 0
    %679 = vmatprep.subr.bf16.mxu0 0
    %680 = vmatpush1.bf16.msra.mxu0 0
    %681 = vmatprep.subr.bf16.mxu0 0
    %682 = vmatpush1.bf16.msra.mxu0 0
    %683 = vmatprep.subr.bf16.mxu0 0
    %684 = vmatpush1.bf16.msra.mxu0 0
    %685 = vmatprep.subr.bf16.mxu0 0
    %686 = vmatpush1.bf16.msra.mxu0 0
    %687 = vmatprep.mubr.bf16.mxu0 0
    %688 = vmatmul.mubr.bf16.gmra.mrb[0].mxu0 %v653
    %v689 = vpop.f32.mrb[0].mxu0
    %v690 = vadd.f32 %v626, %v689
    %v691 = vpop.f32.mrb[0].mxu0
    %v692 = vpop.f32.mrb[0].mxu0
    %v693 = vpop.f32.mrb[0].mxu0
    %694 = vdwg.mxu0
    %v695 = vadd.f32 %v103, %v690
    %v696 = vld [vmem:[%s8] sm:$0x1]
    %v697 = vld [vmem:[%s9] sm:$0x1]
    %v699 = vsel %vm114, %v695, 0
    %701 = vmatprep.subr.mxu0 0.0
    %702 = vmatpush1.msra.mxu0 %v104
    %703 = vmatprep.subr.mxu0 0.0
    %704 = vmatpush1.msra.mxu0 %v105
    %705 = vmatprep.subr.mxu0 0.0
    %706 = vmatpush1.msra.mxu0 %v106
    %707 = vmatprep.subr.mxu0 0.0
    %708 = vmatpush1.msra.mxu0 %v107
    %709 = vmatprep.subr.mxu0 0.0
    %710 = vmatpush1.msra.mxu0 %v108
    %711 = vmatprep.subr.mxu0 0.0
    %712 = vmatpush1.msra.mxu0 %v109
    %713 = vmatprep.subr.mxu0 0.0
    %714 = vmatpush1.msra.mxu0 %v110
    %715 = vmatprep.subr.mxu0 0.0
    %716 = vmatpush1.msra.mxu0 %v111
    %717 = vmatprep.subr.mxu0 0.0
    %718 = vmatpush1.msra.mxu0 0.0
    %719 = vmatprep.subr.mxu0 0.0
    %720 = vmatpush1.msra.mxu0 0.0
    %721 = vmatprep.subr.mxu0 0.0
    %722 = vmatpush1.msra.mxu0 0.0
    %723 = vmatprep.subr.mxu0 0.0
    %724 = vmatpush1.msra.mxu0 0.0
    %725 = vmatprep.subr.mxu0 0.0
    %726 = vmatpush1.msra.mxu0 0.0
    %727 = vmatprep.subr.mxu0 0.0
    %728 = vmatpush1.msra.mxu0 0.0
    %729 = vmatprep.subr.mxu0 0.0
    %730 = vmatpush1.msra.mxu0 0.0
    %731 = vmatprep.subr.mxu0 0.0
    %732 = vmatpush1.msra.mxu0 0.0
    %733 = vmatprep.subr.mxu0 0.0
    %734 = vmatpush1.msra.mxu0 0.0
    %735 = vmatprep.subr.mxu0 0.0
    %736 = vmatpush1.msra.mxu0 0.0
    %737 = vmatprep.subr.mxu0 0.0
    %738 = vmatpush1.msra.mxu0 0.0
    %739 = vmatprep.subr.mxu0 0.0
    %740 = vmatpush1.msra.mxu0 0.0
    %741 = vmatprep.subr.mxu0 0.0
    %742 = vmatpush1.msra.mxu0 0.0
    %743 = vmatprep.subr.mxu0 0.0
    %744 = vmatpush1.msra.mxu0 0.0
    %745 = vmatprep.subr.mxu0 0.0
    %746 = vmatpush1.msra.mxu0 0.0
    %747 = vmatprep.subr.mxu0 0.0
    %748 = vmatpush1.msra.mxu0 0.0
    %749 = vmatprep.subr.mxu0 0.0
    %750 = vmatpush1.msra.mxu0 0.0
    %751 = vmatprep.subr.mxu0 0.0
    %752 = vmatpush1.msra.mxu0 0.0
    %753 = vmatprep.subr.mxu0 0.0
    %754 = vmatpush1.msra.mxu0 0.0
    %755 = vmatprep.subr.mxu0 0.0
    %756 = vmatpush1.msra.mxu0 0.0
    %757 = vmatprep.subr.mxu0 0.0
    %758 = vmatpush1.msra.mxu0 0.0
    %759 = vmatprep.subr.mxu0 0.0
    %760 = vmatpush1.msra.mxu0 0.0
    %761 = vmatprep.subr.mxu0 0.0
    %762 = vmatpush1.msra.mxu0 0.0
    %763 = vmatprep.subr.mxu0 0.0
    %764 = vmatpush1.msra.mxu0 0.0
    %765 = vmatprep.mubr.f32.mxu0 0.0
    %766 = vmatmul.mubr.f32.gmra.mrb[0].mxu0 %v699
    %v767 = vpop.f32.mrb[0].mxu0
    %v768 = vadd.f32 0.0, %v767
    %v769 = vpop.f32.mrb[0].mxu0
    %770 = vdwg.mxu0
    %v771 = vsub.f32 %v695, %v768
    %v772 = vmul.f32 %v771, %v771
    %v774 = vsel %vm114, %v772, 0
    %776 = vmatprep.subr.mxu0 0.0
    %777 = vmatpush1.msra.mxu0 %v104
    %778 = vmatprep.subr.mxu0 0.0
    %779 = vmatpush1.msra.mxu0 %v105
    %780 = vmatprep.subr.mxu0 0.0
    %781 = vmatpush1.msra.mxu0 %v106
    %782 = vmatprep.subr.mxu0 0.0
    %783 = vmatpush1.msra.mxu0 %v107
    %784 = vmatprep.subr.mxu0 0.0
    %785 = vmatpush1.msra.mxu0 %v108
    %786 = vmatprep.subr.mxu0 0.0
    %787 = vmatpush1.msra.mxu0 %v109
    %788 = vmatprep.subr.mxu0 0.0
    %789 = vmatpush1.msra.mxu0 %v110
    %790 = vmatprep.subr.mxu0 0.0
    %791 = vmatpush1.msra.mxu0 %v111
    %792 = vmatprep.subr.mxu0 0.0
    %793 = vmatpush1.msra.mxu0 0.0
    %794 = vmatprep.subr.mxu0 0.0
    %795 = vmatpush1.msra.mxu0 0.0
    %796 = vmatprep.subr.mxu0 0.0
    %797 = vmatpush1.msra.mxu0 0.0
    %798 = vmatprep.subr.mxu0 0.0
    %799 = vmatpush1.msra.mxu0 0.0
    %800 = vmatprep.subr.mxu0 0.0
    %801 = vmatpush1.msra.mxu0 0.0
    %802 = vmatprep.subr.mxu0 0.0
    %803 = vmatpush1.msra.mxu0 0.0
    %804 = vmatprep.subr.mxu0 0.0
    %805 = vmatpush1.msra.mxu0 0.0
    %806 = vmatprep.subr.mxu0 0.0
    %807 = vmatpush1.msra.mxu0 0.0
    %808 = vmatprep.subr.mxu0 0.0
    %809 = vmatpush1.msra.mxu0 0.0
    %810 = vmatprep.subr.mxu0 0.0
    %811 = vmatpush1.msra.mxu0 0.0
    %812 = vmatprep.subr.mxu0 0.0
    %813 = vmatpush1.msra.mxu0 0.0
    %814 = vmatprep.subr.mxu0 0.0
    %815 = vmatpush1.msra.mxu0 0.0
    %816 = vmatprep.subr.mxu0 0.0
    %817 = vmatpush1.msra.mxu0 0.0
    %818 = vmatprep.subr.mxu0 0.0
    %819 = vmatpush1.msra.mxu0 0.0
    %820 = vmatprep.subr.mxu0 0.0
    %821 = vmatpush1.msra.mxu0 0.0
    %822 = vmatprep.subr.mxu0 0.0
    %823 = vmatpush1.msra.mxu0 0.0
    %824 = vmatprep.subr.mxu0 0.0
    %825 = vmatpush1.msra.mxu0 0.0
    %826 = vmatprep.subr.mxu0 0.0
    %827 = vmatpush1.msra.mxu0 0.0
    %828 = vmatprep.subr.mxu0 0.0
    %829 = vmatpush1.msra.mxu0 0.0
    %830 = vmatprep.subr.mxu0 0.0
    %831 = vmatpush1.msra.mxu0 0.0
    %832 = vmatprep.subr.mxu0 0.0
    %833 = vmatpush1.msra.mxu0 0.0
    %834 = vmatprep.subr.mxu0 0.0
    %835 = vmatpush1.msra.mxu0 0.0
    %836 = vmatprep.subr.mxu0 0.0
    %837 = vmatpush1.msra.mxu0 0.0
    %838 = vmatprep.subr.mxu0 0.0
    %839 = vmatpush1.msra.mxu0 0.0
    %840 = vmatprep.mubr.f32.mxu0 0.0
    %841 = vmatmul.mubr.f32.gmra.mrb[0].mxu0 %v774
    %v842 = vpop.f32.mrb[0].mxu0
    %v843 = vadd.f32 1e-05, %v842
    %v844 = vpop.f32.mrb[0].mxu0
    %845 = vdwg.mxu0
    %v846 = vrsqrt.pop %v843
    %v847 = vmul.f32 %v771, %v846
    %v849 = vlaneseq
    %v850 = vshrl.u32 %v849, 7
    %v851 = vsub.s32 0, %v850
    %v852 = vrot.slane %v696, %v851
    %v854 = vmul.f32 %v847, %v852
    %v856 = vlaneseq
    %v857 = vshrl.u32 %v856, 7
    %v858 = vsub.s32 0, %v857
    %v859 = vrot.slane %v697, %v858
    %v861 = vadd.f32 %v854, %v859
    %v862 = vpack.c.bf16 %v861, %v861
    %v863 = vld [vmem:[#allocation6] sm:$0xf]
    %v864 = vld [vmem:[#allocation6 + $0x4] sm:$0xf]
    %v865 = vld [vmem:[#allocation6 + $0x8] sm:$0xf]
    %v866 = vld [vmem:[#allocation6 + $0xc] sm:$0xf]
    %v867 = vld [vmem:[#allocation6 + $0x10] sm:$0xf]
    %v868 = vld [vmem:[#allocation6 + $0x14] sm:$0xf]
    %v869 = vld [vmem:[#allocation6 + $0x18] sm:$0xf]
    %v870 = vld [vmem:[#allocation6 + $0x1c] sm:$0xf]
    %v871 = vld [vmem:[%s11] sm:$0x1]
    %v873 = vlaneseq
    %v874 = vshrl.u32 %v873, 7
    %v875 = vsub.s32 0, %v874
    %v876 = vrot.slane %v871, %v875
    %v886 = vunpack.c.l.b16 %v863
    %v887 = vunpack.c.l.b16 %v864
    %v888 = vunpack.c.l.b16 %v865
    %v889 = vunpack.c.l.b16 %v866
    %v890 = vunpack.c.l.b16 %v867
    %v891 = vunpack.c.l.b16 %v868
    %v892 = vunpack.c.l.b16 %v869
    %v893 = vunpack.c.l.b16 %v870
    %v894 = vpack.c.b16 %v887, %v886
    %v895 = vpack.c.b16 %v889, %v888
    %v896 = vpack.c.b16 %v891, %v890
    %v897 = vpack.c.b16 %v893, %v892
    %v903 = vsel %vm114, %v862, 0
    %905 = vmatprep.subr.bf16.mxu0 0
    %906 = vmatpush1.bf16.msra.mxu0 %v894
    %907 = vmatprep.subr.bf16.mxu0 0
    %908 = vmatpush1.bf16.msra.mxu0 %v895
    %909 = vmatprep.subr.bf16.mxu0 0
    %910 = vmatpush1.bf16.msra.mxu0 %v896
    %911 = vmatprep.subr.bf16.mxu0 0
    %912 = vmatpush1.bf16.msra.mxu0 %v897
    %913 = vmatprep.subr.bf16.mxu0 0
    %914 = vmatpush1.bf16.msra.mxu0 0
    %915 = vmatprep.subr.bf16.mxu0 0
    %916 = vmatpush1.bf16.msra.mxu0 0
    %917 = vmatprep.subr.bf16.mxu0 0
    %918 = vmatpush1.bf16.msra.mxu0 0
    %919 = vmatprep.subr.bf16.mxu0 0
    %920 = vmatpush1.bf16.msra.mxu0 0
    %921 = vmatprep.subr.bf16.mxu0 0
    %922 = vmatpush1.bf16.msra.mxu0 0
    %923 = vmatprep.subr.bf16.mxu0 0
    %924 = vmatpush1.bf16.msra.mxu0 0
    %925 = vmatprep.subr.bf16.mxu0 0
    %926 = vmatpush1.bf16.msra.mxu0 0
    %927 = vmatprep.subr.bf16.mxu0 0
    %928 = vmatpush1.bf16.msra.mxu0 0
    %929 = vmatprep.subr.bf16.mxu0 0
    %930 = vmatpush1.bf16.msra.mxu0 0
    %931 = vmatprep.subr.bf16.mxu0 0
    %932 = vmatpush1.bf16.msra.mxu0 0
    %933 = vmatprep.subr.bf16.mxu0 0
    %934 = vmatpush1.bf16.msra.mxu0 0
    %935 = vmatprep.subr.bf16.mxu0 0
    %936 = vmatpush1.bf16.msra.mxu0 0
    %937 = vmatprep.mubr.bf16.mxu0 0
    %938 = vmatmul.mubr.bf16.gmra.mrb[0].mxu0 %v903
    %v939 = vpop.f32.mrb[0].mxu0
    %v940 = vadd.f32 %v876, %v939
    %v941 = vpop.f32.mrb[0].mxu0
    %v942 = vpop.f32.mrb[0].mxu0
    %v943 = vpop.f32.mrb[0].mxu0
    %944 = vdwg.mxu0
    %v945 = vmul.f32 %v940, 1.702
    %v946 = vxor.u32 %v945, 2147483648
    %v947 = vmul.f32 %v946, 1.442695
    %v948 = vpow.pop %v947
    %v949 = vadd.f32 %v948, 1.0
    %v950 = vrcp.pop %v949
    %v951 = vmul.f32 1.0, %v950
    %v952 = vmul.f32 %v940, %v951
    %v953 = vpack.c.bf16 %v952, %v952
    %v954 = vld [vmem:[#allocation7] sm:$0xf]
    %v955 = vld [vmem:[#allocation7 + $0x4] sm:$0xf]
    %v956 = vld [vmem:[#allocation7 + $0x8] sm:$0xf]
    %v957 = vld [vmem:[#allocation7 + $0xc] sm:$0xf]
    %v958 = vld [vmem:[#allocation7 + $0x10] sm:$0xf]
    %v959 = vld [vmem:[#allocation7 + $0x14] sm:$0xf]
    %v960 = vld [vmem:[#allocation7 + $0x18] sm:$0xf]
    %v961 = vld [vmem:[#allocation7 + $0x1c] sm:$0xf]
    %v962 = vld [vmem:[%s13] sm:$0x1]
    %v964 = vlaneseq
    %v965 = vshrl.u32 %v964, 7
    %v966 = vsub.s32 0, %v965
    %v967 = vrot.slane %v962, %v966
    %v977 = vunpack.c.l.b16 %v954
    %v978 = vunpack.c.l.b16 %v955
    %v979 = vunpack.c.l.b16 %v956
    %v980 = vunpack.c.l.b16 %v957
    %v981 = vunpack.c.l.b16 %v958
    %v982 = vunpack.c.l.b16 %v959
    %v983 = vunpack.c.l.b16 %v960
    %v984 = vunpack.c.l.b16 %v961
    %v985 = vpack.c.b16 %v978, %v977
    %v986 = vpack.c.b16 %v980, %v979
    %v987 = vpack.c.b16 %v982, %v981
    %v988 = vpack.c.b16 %v984, %v983
    %v994 = vsel %vm114, %v953, 0
    %996 = vmatprep.subr.bf16.mxu0 0
    %997 = vmatpush1.bf16.msra.mxu0 %v985
    %998 = vmatprep.subr.bf16.mxu0 0
    %999 = vmatpush1.bf16.msra.mxu0 %v986
    %1000 = vmatprep.subr.bf16.mxu0 0
    %1001 = vmatpush1.bf16.msra.mxu0 %v987
    %1002 = vmatprep.subr.bf16.mxu0 0
    %1003 = vmatpush1.bf16.msra.mxu0 %v988
    %1004 = vmatprep.subr.bf16.mxu0 0
    %1005 = vmatpush1.bf16.msra.mxu0 0
    %1006 = vmatprep.subr.bf16.mxu0 0
    %1007 = vmatpush1.bf16.msra.mxu0 0
    %1008 = vmatprep.subr.bf16.mxu0 0
    %1009 = vmatpush1.bf16.msra.mxu0 0
    %1010 = vmatprep.subr.bf16.mxu0 0
    %1011 = vmatpush1.bf16.msra.mxu0 0
    %1012 = vmatprep.subr.bf16.mxu0 0
    %1013 = vmatpush1.bf16.msra.mxu0 0
    %1014 = vmatprep.subr.bf16.mxu0 0
    %1015 = vmatpush1.bf16.msra.mxu0 0
    %1016 = vmatprep.subr.bf16.mxu0 0
    %1017 = vmatpush1.bf16.msra.mxu0 0
    %1018 = vmatprep.subr.bf16.mxu0 0
    %1019 = vmatpush1.bf16.msra.mxu0 0
    %1020 = vmatprep.subr.bf16.mxu0 0
    %1021 = vmatpush1.bf16.msra.mxu0 0
    %1022 = vmatprep.subr.bf16.mxu0 0
    %1023 = vmatpush1.bf16.msra.mxu0 0
    %1024 = vmatprep.subr.bf16.mxu0 0
    %1025 = vmatpush1.bf16.msra.mxu0 0
    %1026 = vmatprep.subr.bf16.mxu0 0
    %1027 = vmatpush1.bf16.msra.mxu0 0
    %1028 = vmatprep.mubr.bf16.mxu0 0
    %1029 = vmatmul.mubr.bf16.gmra.mrb[0].mxu0 %v994
    %v1030 = vpop.f32.mrb[0].mxu0
    %v1031 = vadd.f32 %v967, %v1030
    %v1032 = vpop.f32.mrb[0].mxu0
    %v1033 = vpop.f32.mrb[0].mxu0
    %v1034 = vpop.f32.mrb[0].mxu0
    %1035 = vdwg.mxu0
    %v1036 = vadd.f32 %v695, %v1031
    %1037 = vst.msk [vmem:[%s14] sm:$0xff] %vm114, %v1036
    // Predicated region
    $region74: #{residual_self_attention_pallas.1} parent=1 // pred_check
      _
    $region75: #{residual_self_attention_pallas.1} parent=1 // pred_check_branch
      %1039 = sbr.rel (0) target = $region77
    $region76: #{residual_self_attention_pallas.1} parent=1 // pred_region
      _
    $region77: #{residual_self_attention_pallas.1} parent=1 // pred_fallthru
      _
    // Predicated region
    $region78: #{residual_self_attention_pallas.1} parent=1 // pred_check
      _
    $region79: #{residual_self_attention_pallas.1} parent=1 // pred_check_branch
      %1041 = sbr.rel (0) target = $region81
    $region80: #{residual_self_attention_pallas.1} parent=1 // pred_region
      _
    $region81: #{residual_self_attention_pallas.1} parent=1 // pred_fallthru
      _
    %1042 = vsyncpa [#allocation3], 1
    %1043 = vsyncpa [#allocation5], 1
    %1044 = vsyncpa [#allocation8], 1

</llo_original>
